<compile_context>
chip_gen: v7x
topology: tpu7x:2x2x1
jax: 0.10.0
libtpu: 0.0.40
codegen_flags: <defaults>
</compile_context>

<pallas_src>
import functools

import jax
import jax.numpy as jnp
import numpy as np
from jax.experimental import pallas as pl
from jax.experimental.pallas import tpu as pltpu


# ----------------------------- Pallas kernel --------------------------------
def _interp_kernel(x1a_ref, x2a_ref, pts2_ref, out_ref, *, k, use_bf16):
    """One (batch, N-tile) block: inverse-distance-weighted k-NN interpolation.

    x1a_ref : (1, TN, 5)  augmented fine coords  [x, y, z, |p|^2, 1]
    x2a_ref : (1, 5, S)   augmented coarse coords [-2x, -2y, -2z, 1, |p|^2]^T
    pts2_ref: (1, S, D2)  coarse features (point-major)
    out_ref : (1, TN, D2) interpolated features (point-major)
    """
    x1a = x1a_ref[0]                         # (TN, 5) f32
    x2a = x2a_ref[0]                         # (5, S)  f32
    p2 = pts2_ref[0]                         # (S, D2) f32
    tn = x1a.shape[0]
    s = x2a.shape[1]

    # Pairwise squared distances in a single MXU call (no broadcast relayout,
    # no in-kernel transpose): d[i,j] = |x1_i|^2 + |x2_j|^2 - 2 x1_i . x2_j
    d = jnp.dot(x1a, x2a, preferred_element_type=jnp.float32)
    d = jnp.maximum(d, 0.0)  # guard tiny negatives (and -0.0) from cancellation

    # Pack (distance bit pattern | column index) into one int32 key. For
    # non-negative finite f32 the bit pattern is order preserving, so a single
    # lane-min per neighbor yields both the min distance (truncated low bits)
    # and its argmin. Keys are unique per row (distinct column idx in low bits).
    idx_bits = max(1, (s - 1).bit_length())
    low_mask = (1 << idx_bits) - 1
    high_mask = ~low_mask
    col = jax.lax.broadcasted_iota(jnp.int32, (tn, s), 1)
    key = (pltpu.bitcast(d, jnp.int32) & jnp.int32(high_mask)) | col

    big = jnp.int32(jnp.iinfo(jnp.int32).max)
    w = jnp.zeros((tn, s), jnp.float32)       # unnormalized sparse weights
    norm = jnp.zeros((tn, 1), jnp.float32)
    for _ in range(k):                         # k is tiny (de_neighbors), unrolled
        kmin = jnp.min(key, axis=-1, keepdims=True)                  # 1 XLU reduction
        m = pltpu.bitcast(kmin & jnp.int32(high_mask), jnp.float32)  # min distance
        eq = key == kmin                                             # exact one-hot
        recip = 1.0 / (m + 1e-8)                                     # (TN, 1)
        w = jnp.where(eq, recip, w)
        norm = norm + recip
        key = jnp.where(eq, big, key)                                # exclude selected

    # interpolated = (w_unnorm @ points2) * (1 / norm)
    # Normalization is applied after the matmul, on the small (TN, D2) result.
    if use_bf16:
        interp = jnp.dot(w.astype(jnp.bfloat16), p2.astype(jnp.bfloat16),
                         preferred_element_type=jnp.float32)
        inv_norm = pl.reciprocal(norm, approx=True)
    else:
        interp = jnp.dot(w, p2, preferred_element_type=jnp.float32)
        inv_norm = 1.0 / norm
    out_ref[0] = (interp * inv_norm).astype(out_ref.dtype)


# ------------------------------ wrappers -------------------------------------
def _pick_tile(n):
    """Largest N-tile (multiple of 8, <= 512) dividing N; otherwise full extent."""
    if n <= 512:
        return n
    for t in range(512, 7, -8):
        if n % t == 0:
            return t
    return n  # irregular N: one full-extent tile


def _augment(xyz1, xyz2):
    """Fold |.|^2 terms into the distance matmul's contraction dim (K: 3 -> 5)."""
    xyz1 = xyz1.astype(jnp.float32)
    xyz2 = xyz2.astype(jnp.float32)
    sq1 = jnp.sum(xyz1 * xyz1, axis=-1, keepdims=True)
    sq2 = jnp.sum(xyz2 * xyz2, axis=-1, keepdims=True)
    x1a = jnp.concatenate([xyz1, sq1, jnp.ones_like(sq1)], axis=-1)          # (B, N, 5)
    x2a = jnp.concatenate([-2.0 * xyz2, jnp.ones_like(sq2), sq2], axis=-1)   # (B, S, 5)
    return x1a, jnp.transpose(x2a, (0, 2, 1))                                # (B, 5, S)


def _interpolate(xyz1, xyz2, points2_pm, de_neighbors):
    """xyz1 (B,N,3), xyz2 (B,S,3), points2_pm (B,S,D2) -> (B,N,D2) (point-major)."""
    b, n, _ = xyz1.shape
    s = xyz2.shape[1]
    d2 = points2_pm.shape[2]
    k = min(de_neighbors, s)
    use_bf16 = s >= 128  # bf16 only where the interp matmul is big enough to matter

    x1a, x2a_t = _augment(xyz1, xyz2)
    points2_pm = points2_pm.astype(jnp.float32)
    c = x1a.shape[2]  # 5

    tn = _pick_tile(n)

    # Explicit VMEM budget: double-buffered blocks + ~8 live (TN,S) temps,
    # clamped to the v7x 64 MiB physical ceiling.
    blk_bytes = 4 * (2 * tn * c + 2 * c * s + 2 * s * d2 + 2 * tn * d2 + 8 * tn * s)
    vmem_limit = int(min(max(2 * blk_bytes, 32 * 1024 * 1024), 64 * 1024 * 1024))

    return pl.pallas_call(
        functools.partial(_interp_kernel, k=k, use_bf16=use_bf16),
        out_shape=jax.ShapeDtypeStruct((b, n, d2), jnp.float32),
        grid=(b, n // tn),
        in_specs=[
            pl.BlockSpec((1, tn, c), lambda bi, ni: (bi, ni, 0)),
            pl.BlockSpec((1, c, s), lambda bi, ni: (bi, 0, 0)),
            pl.BlockSpec((1, s, d2), lambda bi, ni: (bi, 0, 0)),
        ],
        out_specs=pl.BlockSpec((1, tn, d2), lambda bi, ni: (bi, ni, 0)),
        compiler_params=pltpu.CompilerParams(
            dimension_semantics=("parallel", "parallel"),
            vmem_limit_bytes=vmem_limit),
    )(x1a, x2a_t, points2_pm)


def _interp_dispatch(xyz1, xyz2, points2_pm, de_neighbors):
    b, n, _ = xyz1.shape
    s, d2 = points2_pm.shape[1], points2_pm.shape[2]
    if s == 1:
        return jnp.broadcast_to(points2_pm, (b, n, d2)).astype(jnp.float32)
    return _interpolate(xyz1, xyz2, points2_pm, de_neighbors)


def propagate(xyz1, xyz2, points1, points2, de_neighbors):
    """Mirror of DecNP.propagate (channel-first interface).
    xyz1 (B,N,3), xyz2 (B,S,3), points1 (B,D1,N) or None, points2 (B,D2,S)
    returns (B, D1+D2, N)."""
    interp = _interp_dispatch(xyz1, xyz2, jnp.transpose(points2, (0, 2, 1)),
                              de_neighbors)
    if points1 is not None:
        interp = jnp.concatenate([jnp.transpose(points1, (0, 2, 1)), interp], axis=-1)
    return jnp.transpose(interp, (0, 2, 1))


def decnp_forward(xyz_list, x_list, num_stages, de_neighbors):
    """Mirror of DecNP.forward. Running features are kept point-major (B, N, D)
    between stages; channel-first layout is restored with a single transpose."""
    xyz_list = list(reversed(xyz_list))
    x_list = list(reversed(x_list))
    x_pm = jnp.transpose(x_list[0], (0, 2, 1))  # (B, S, D) point-major
    for i in range(num_stages):
        xyz1 = xyz_list[i + 1]   # fine
        xyz2 = xyz_list[i]       # coarse
        interp = _interp_dispatch(xyz1, xyz2, x_pm, de_neighbors)  # (B, N, D)
        points1 = x_list[i + 1]
        if points1 is not None:
            x_pm = jnp.concatenate([jnp.transpose(points1, (0, 2, 1)), interp], axis=-1)
        else:
            x_pm = interp
    return jnp.transpose(x_pm, (0, 2, 1))  # (B, D_total, N)


# ---------------- pure-JAX reference (for correctness check) ----------------
def _ref_propagate(xyz1, xyz2, points1, points2, k):
    p2 = jnp.transpose(points2, (0, 2, 1))
    b, n, _ = xyz1.shape
    s = xyz2.shape[1]
    if s == 1:
        interp = jnp.broadcast_to(p2, (b, n, p2.shape[-1]))
    else:
        d = (-2.0 * jnp.einsum("bnc,bsc->bns", xyz1, xyz2)
             + jnp.sum(xyz1 ** 2, -1)[:, :, None]
             + jnp.sum(xyz2 ** 2, -1)[:, None, :])
        neg_d, idx = jax.lax.top_k(-d, min(k, s))
        dists = -neg_d
        recip = 1.0 / (dists + 1e-8)
        w = recip / jnp.sum(recip, -1, keepdims=True)
        gathered = jax.vmap(lambda pts, ids: pts[ids])(p2, idx)  # (B,N,k,D2)
        interp = jnp.sum(gathered * w[..., None], axis=2)
    if points1 is not None:
        interp = jnp.concatenate([jnp.transpose(points1, (0, 2, 1)), interp], axis=-1)
    return jnp.transpose(interp, (0, 2, 1))


def _ref_forward(xyz_list, x_list, num_stages, k):
    xyz_list = list(reversed(xyz_list))
    x_list = list(reversed(x_list))
    x = x_list[0]
    for i in range(num_stages):
        x = _ref_propagate(xyz_list[i + 1], xyz_list[i], x_list[i + 1], x, k)
    return x


if __name__ == "__main__":
    num_stages = 2
    de_neighbors = 4

    key = jax.random.PRNGKey(0)
    k0, k1, k2, k3, k4, k5 = jax.random.split(key, 6)

    B = 2
    # point hierarchy (finest -> coarsest), feature dims grow with coarseness
    N0, N1, N2 = 64, 32, 16
    D0, D1, D2 = 16, 32, 64

    xyz_list = [
        jax.random.normal(k0, (B, N0, 3), jnp.float32),
        jax.random.normal(k1, (B, N1, 3), jnp.float32),
        jax.random.normal(k2, (B, N2, 3), jnp.float32),
    ]
    x_list = [
        jax.random.normal(k3, (B, D0, N0), jnp.float32),
        jax.random.normal(k4, (B, D1, N1), jnp.float32),
        jax.random.normal(k5, (B, D2, N2), jnp.float32),
    ]

    out = decnp_forward(xyz_list, x_list, num_stages, de_neighbors)
    out = jax.block_until_ready(out)
    assert out.shape == (B, D0 + D1 + D2, N0), out.shape

    ref = jax.block_until_ready(_ref_forward(xyz_list, x_list, num_stages, de_neighbors))
    # Small-S stages run the interpolation matmul in f32, so this is near-exact;
    # tolerance kept loose enough to also cover the bf16 large-S path.
    np.testing.assert_allclose(np.asarray(out), np.asarray(ref), rtol=3e-2, atol=3e-2)

    print("KERNEL_OK")
</pallas_src>

<mosaic_0001>
module attributes {stable_mosaic.version = 11 : i64} {
  func.func @_interp_kernel(%arg0: i32, %arg1: i32, %arg2: memref<1x32x5xf32, #tpu.memory_space<vmem>>, %arg3: memref<1x5x16xf32, #tpu.memory_space<vmem>>, %arg4: memref<1x16x64xf32, #tpu.memory_space<vmem>>, %arg5: memref<1x32x64xf32, #tpu.memory_space<vmem>>) attributes {dimension_semantics = [#tpu.dimension_semantics<parallel>, #tpu.dimension_semantics<parallel>], iteration_bounds = array<i64: 2, 1>, scalar_prefetch = 0 : i64, scratch_operands = 0 : i64, tpu.core_type = #tpu.core_type<tc>, window_params = [{transform_indices = @transform_0, window_bounds = array<i64: 1, 32, 5>}, {transform_indices = @transform_1, window_bounds = array<i64: 1, 5, 16>}, {transform_indices = @transform_2, window_bounds = array<i64: 1, 16, 64>}, {transform_indices = @transform_3, window_bounds = array<i64: 1, 32, 64>}]} {
    %c0 = arith.constant 0 : index
    %c0_0 = arith.constant 0 : index
    %c0_1 = arith.constant 0 : index
    %0 = vector.load %arg2[%c0, %c0_0, %c0_1] : memref<1x32x5xf32, #tpu.memory_space<vmem>>, vector<1x32x5xf32>
    %1 = vector.shape_cast %0 : vector<1x32x5xf32> to vector<32x5xf32>
    %c0_2 = arith.constant 0 : index
    %c0_3 = arith.constant 0 : index
    %c0_4 = arith.constant 0 : index
    %2 = vector.load %arg3[%c0_2, %c0_3, %c0_4] : memref<1x5x16xf32, #tpu.memory_space<vmem>>, vector<1x5x16xf32>
    %3 = vector.shape_cast %2 : vector<1x5x16xf32> to vector<5x16xf32>
    %c0_5 = arith.constant 0 : index
    %c0_6 = arith.constant 0 : index
    %c0_7 = arith.constant 0 : index
    %4 = vector.load %arg4[%c0_5, %c0_6, %c0_7] : memref<1x16x64xf32, #tpu.memory_space<vmem>>, vector<1x16x64xf32>
    %5 = vector.shape_cast %4 : vector<1x16x64xf32> to vector<16x64xf32>
    %cst = arith.constant dense<0.000000e+00> : vector<32x16xf32>
    %6 = tpu.matmul %1, %3, %cst {dimension_numbers = #tpu.dot_dimension_numbers<[1], [0], [0], [1], [0, 0, 1, 1], [], []>} : vector<32x5xf32>, vector<5x16xf32>, vector<32x16xf32> -> vector<32x16xf32>
    %cst_8 = arith.constant 0.000000e+00 : f32
    %7 = vector.broadcast %cst_8 : f32 to vector<32x16xf32>
    %8 = arith.maximumf %6, %7 : vector<32x16xf32>
    %9 = tpu.iota {dimensions = array<i32: 1>} : vector<32x16xi32>
    %10 = tpu.bitcast %8 : vector<32x16xf32> -> vector<32x16xi32>
    %c-16_i32 = arith.constant -16 : i32
    %11 = vector.broadcast %c-16_i32 : i32 to vector<32x16xi32>
    %12 = arith.andi %10, %11 : vector<32x16xi32>
    %13 = arith.ori %12, %9 : vector<32x16xi32>
    %cst_9 = arith.constant 0.000000e+00 : f32
    %14 = vector.broadcast %cst_9 : f32 to vector<32x16xf32>
    %cst_10 = arith.constant 0.000000e+00 : f32
    %15 = vector.broadcast %cst_10 : f32 to vector<32x1xf32>
    %cst_11 = arith.constant dense<2147483647> : vector<32xi32>
    %16 = vector.multi_reduction <minsi>, %13, %cst_11 [1] : vector<32x16xi32> to vector<32xi32>
    %17 = vector.shape_cast %16 : vector<32xi32> to vector<32x1xi32>
    %c-16_i32_12 = arith.constant -16 : i32
    %18 = vector.broadcast %c-16_i32_12 : i32 to vector<32x1xi32>
    %19 = arith.andi %17, %18 : vector<32x1xi32>
    %20 = tpu.bitcast %19 : vector<32x1xi32> -> vector<32x1xf32>
    %21 = vector.broadcast %17 : vector<32x1xi32> to vector<32x16xi32>
    %22 = arith.cmpi eq, %13, %21 : vector<32x16xi32>
    %cst_13 = arith.constant 9.99999993E-9 : f32
    %23 = vector.broadcast %cst_13 : f32 to vector<32x1xf32>
    %24 = arith.addf %20, %23 : vector<32x1xf32>
    %cst_14 = arith.constant 1.000000e+00 : f32
    %25 = vector.broadcast %cst_14 : f32 to vector<32x1xf32>
    %26 = arith.divf %25, %24 : vector<32x1xf32>
    %27 = vector.shape_cast %26 : vector<32x1xf32> to vector<32x1xf32>
    %28 = vector.broadcast %27 : vector<32x1xf32> to vector<32x16xf32>
    %29 = arith.select %22, %28, %14 : vector<32x16xi1>, vector<32x16xf32>
    %30 = arith.addf %15, %26 : vector<32x1xf32>
    %c2147483647_i32 = arith.constant 2147483647 : i32
    %31 = vector.broadcast %c2147483647_i32 : i32 to vector<32x16xi32>
    %32 = arith.select %22, %31, %13 : vector<32x16xi1>, vector<32x16xi32>
    %cst_15 = arith.constant dense<2147483647> : vector<32xi32>
    %33 = vector.multi_reduction <minsi>, %32, %cst_15 [1] : vector<32x16xi32> to vector<32xi32>
    %34 = vector.shape_cast %33 : vector<32xi32> to vector<32x1xi32>
    %c-16_i32_16 = arith.constant -16 : i32
    %35 = vector.broadcast %c-16_i32_16 : i32 to vector<32x1xi32>
    %36 = arith.andi %34, %35 : vector<32x1xi32>
    %37 = tpu.bitcast %36 : vector<32x1xi32> -> vector<32x1xf32>
    %38 = vector.broadcast %34 : vector<32x1xi32> to vector<32x16xi32>
    %39 = arith.cmpi eq, %32, %38 : vector<32x16xi32>
    %cst_17 = arith.constant 9.99999993E-9 : f32
    %40 = vector.broadcast %cst_17 : f32 to vector<32x1xf32>
    %41 = arith.addf %37, %40 : vector<32x1xf32>
    %cst_18 = arith.constant 1.000000e+00 : f32
    %42 = vector.broadcast %cst_18 : f32 to vector<32x1xf32>
    %43 = arith.divf %42, %41 : vector<32x1xf32>
    %44 = vector.shape_cast %43 : vector<32x1xf32> to vector<32x1xf32>
    %45 = vector.broadcast %44 : vector<32x1xf32> to vector<32x16xf32>
    %46 = arith.select %39, %45, %29 : vector<32x16xi1>, vector<32x16xf32>
    %47 = arith.addf %30, %43 : vector<32x1xf32>
    %c2147483647_i32_19 = arith.constant 2147483647 : i32
    %48 = vector.broadcast %c2147483647_i32_19 : i32 to vector<32x16xi32>
    %49 = arith.select %39, %48, %32 : vector<32x16xi1>, vector<32x16xi32>
    %cst_20 = arith.constant dense<2147483647> : vector<32xi32>
    %50 = vector.multi_reduction <minsi>, %49, %cst_20 [1] : vector<32x16xi32> to vector<32xi32>
    %51 = vector.shape_cast %50 : vector<32xi32> to vector<32x1xi32>
    %c-16_i32_21 = arith.constant -16 : i32
    %52 = vector.broadcast %c-16_i32_21 : i32 to vector<32x1xi32>
    %53 = arith.andi %51, %52 : vector<32x1xi32>
    %54 = tpu.bitcast %53 : vector<32x1xi32> -> vector<32x1xf32>
    %55 = vector.broadcast %51 : vector<32x1xi32> to vector<32x16xi32>
    %56 = arith.cmpi eq, %49, %55 : vector<32x16xi32>
    %cst_22 = arith.constant 9.99999993E-9 : f32
    %57 = vector.broadcast %cst_22 : f32 to vector<32x1xf32>
    %58 = arith.addf %54, %57 : vector<32x1xf32>
    %cst_23 = arith.constant 1.000000e+00 : f32
    %59 = vector.broadcast %cst_23 : f32 to vector<32x1xf32>
    %60 = arith.divf %59, %58 : vector<32x1xf32>
    %61 = vector.shape_cast %60 : vector<32x1xf32> to vector<32x1xf32>
    %62 = vector.broadcast %61 : vector<32x1xf32> to vector<32x16xf32>
    %63 = arith.select %56, %62, %46 : vector<32x16xi1>, vector<32x16xf32>
    %64 = arith.addf %47, %60 : vector<32x1xf32>
    %c2147483647_i32_24 = arith.constant 2147483647 : i32
    %65 = vector.broadcast %c2147483647_i32_24 : i32 to vector<32x16xi32>
    %66 = arith.select %56, %65, %49 : vector<32x16xi1>, vector<32x16xi32>
    %cst_25 = arith.constant dense<2147483647> : vector<32xi32>
    %67 = vector.multi_reduction <minsi>, %66, %cst_25 [1] : vector<32x16xi32> to vector<32xi32>
    %68 = vector.shape_cast %67 : vector<32xi32> to vector<32x1xi32>
    %c-16_i32_26 = arith.constant -16 : i32
    %69 = vector.broadcast %c-16_i32_26 : i32 to vector<32x1xi32>
    %70 = arith.andi %68, %69 : vector<32x1xi32>
    %71 = tpu.bitcast %70 : vector<32x1xi32> -> vector<32x1xf32>
    %72 = vector.broadcast %68 : vector<32x1xi32> to vector<32x16xi32>
    %73 = arith.cmpi eq, %66, %72 : vector<32x16xi32>
    %cst_27 = arith.constant 9.99999993E-9 : f32
    %74 = vector.broadcast %cst_27 : f32 to vector<32x1xf32>
    %75 = arith.addf %71, %74 : vector<32x1xf32>
    %cst_28 = arith.constant 1.000000e+00 : f32
    %76 = vector.broadcast %cst_28 : f32 to vector<32x1xf32>
    %77 = arith.divf %76, %75 : vector<32x1xf32>
    %78 = vector.shape_cast %77 : vector<32x1xf32> to vector<32x1xf32>
    %79 = vector.broadcast %78 : vector<32x1xf32> to vector<32x16xf32>
    %80 = arith.select %73, %79, %63 : vector<32x16xi1>, vector<32x16xf32>
    %81 = arith.addf %64, %77 : vector<32x1xf32>
    %cst_29 = arith.constant dense<0.000000e+00> : vector<32x64xf32>
    %82 = tpu.matmul %80, %5, %cst_29 {dimension_numbers = #tpu.dot_dimension_numbers<[1], [0], [0], [1], [0, 0, 1, 1], [], []>} : vector<32x16xf32>, vector<16x64xf32>, vector<32x64xf32> -> vector<32x64xf32>
    %cst_30 = arith.constant 1.000000e+00 : f32
    %83 = vector.broadcast %cst_30 : f32 to vector<32x1xf32>
    %84 = arith.divf %83, %81 : vector<32x1xf32>
    %85 = vector.broadcast %84 : vector<32x1xf32> to vector<32x64xf32>
    %86 = arith.mulf %82, %85 : vector<32x64xf32>
    %c0_31 = arith.constant 0 : index
    %c0_32 = arith.constant 0 : index
    %c0_33 = arith.constant 0 : index
    %87 = vector.load %arg5[%c0_31, %c0_32, %c0_33] : memref<1x32x64xf32, #tpu.memory_space<vmem>>, vector<1x32x64xf32>
    %88 = vector.shape_cast %87 : vector<1x32x64xf32> to vector<32x64xf32>
    %89 = vector.shape_cast %86 : vector<32x64xf32> to vector<1x32x64xf32>
    tpu.vector_store %arg5[%c0_31, %c0_32, %c0_33], %89 {strides = array<i32>} : memref<1x32x64xf32, #tpu.memory_space<vmem>>, vector<1x32x64xf32>,
    return
  }
  func.func @transform_0(%arg0: i32, %arg1: i32) -> (i32, i32, i32) {
    %c0_i32 = arith.constant 0 : i32
    %c0_i32_0 = arith.constant 0 : i32
    return %arg0, %arg1, %c0_i32 : i32, i32, i32
  }
  func.func @transform_1(%arg0: i32, %arg1: i32) -> (i32, i32, i32) {
    %c0_i32 = arith.constant 0 : i32
    %c0_i32_0 = arith.constant 0 : i32
    %c0_i32_1 = arith.constant 0 : i32
    return %arg0, %c0_i32, %c0_i32_0 : i32, i32, i32
  }
  func.func @transform_2(%arg0: i32, %arg1: i32) -> (i32, i32, i32) {
    %c0_i32 = arith.constant 0 : i32
    %c0_i32_0 = arith.constant 0 : i32
    %c0_i32_1 = arith.constant 0 : i32
    return %arg0, %c0_i32, %c0_i32_0 : i32, i32, i32
  }
  func.func @transform_3(%arg0: i32, %arg1: i32) -> (i32, i32, i32) {
    %c0_i32 = arith.constant 0 : i32
    %c0_i32_0 = arith.constant 0 : i32
    return %arg0, %arg1, %c0_i32 : i32, i32, i32
  }
}

</mosaic_0001>

<llo_original>
// kernel: tpu_custom_call.1
$region0: #{tpu_custom_call.1}
  #allocation0 [shape = 'u32[]', space=smem, size = 0x4, offset = 0x4, fixed_abs, tag = 'smem constant byte address 0x4 - core index']
  #allocation1 [shape = 'u32[144,128]{1,0:T(1,128)}', space=vmem, size = 0x12000, scoped, tag = 'internal scratch']
  %s0 = inlined_call_operand.vmem [shape: f32[2,32,5], index: 0, kind: input, shape index: {}]
  %s1 = inlined_call_operand.vmem [shape: f32[2,5,16], index: 1, kind: input, shape index: {}]
  %s2 = inlined_call_operand.vmem [shape: f32[2,16,64], index: 2, kind: input, shape index: {}]
  %s3 = inlined_call_operand.hbm [shape: f32[2,32,64], index: 3, kind: output, shape index: {}]
  %s4 = sld [smem:[#allocation0]]
  $region45: #{tpu_custom_call.1} parent=0
    _
  %s6 = ssub.s32 1, %s4
  %s7 = scalar_select 0, %s6, %s4
  $region1: #{tpu_custom_call.1} parent=0
    #allocation2 [shape = 'u8[32768]{0}', space=vmem, size = 0x8000, scoped, tag = 'output window, operand 0']
    #allocation3 [shape = 's32[2]{0}', space=sflag, size = 0x8, scoped, tag = 'scoped memory for tpu_custom_call.1']
    %8 = vsyncpa [#allocation3], 0
    %s9 = scalar_lea.sflag [#allocation3], 1
    %10 = vsyncpa %s9, 0
    loop: start=0, step=1, limit=4
    $region2: #{tpu_custom_call.1} parent=1 // loop_pre_header
      _
    $region3: #{tpu_custom_call.1} parent=1 // loop_header
      %s12 = sphi 0, %s16
      %p13 = scmp.ge.s32.totalorder %s12, 4
      %s19 = sphi 0, %s31
      %s20 = sphi 0, %s27
      %s21 = sphi 0, %s19
      %s22 = sphi 0, %s20
      %s23 = sphi 0, %s21
      %s24 = sphi 0, %s22
      %s36 = sphi 0, %s38
      %s39 = sphi 0, %s36
      %s40 = sphi 0, %s39
      %s56 = sphi 0, %s40
      %s62 = sphi 0, %s64
      %s65 = sphi 0, %s62
      %s66 = sphi 0, %s65
      %s82 = sphi 0, %s66
      %s88 = sphi 0, %s90
      %s91 = sphi 0, %s88
      %s92 = sphi 0, %s91
      %s108 = sphi 0, %s92
      %s116 = sphi 0, %s118
      %s119 = sphi 0, %s116
      %s120 = sphi 0, %s119
      %s136 = sphi 0, %s120
    $region4: #{tpu_custom_call.1} parent=1 // loop_header_branch
      %15 = sbr.rel (%p13) target = $region8
    $region5: #{tpu_custom_call.1} parent=1 // loop_body
      %s17 = ssub.s32 %s12, 1
      %s18 = ssub.s32 %s12, 2
      %s25 = sadd.s32 1, %s20
      %p26 = scmp.ge.s32.totalorder %s25, 1
      %s27 = scalar_select %p26, 0, %s25
      %s28 = sadd.s32 1, %s19
      %s29 = scalar_select %p26, %s28, %s19
      %p30 = scmp.ge.s32.totalorder %s29, 2
      %s31 = scalar_select %p30, 0, %s29
      %s32 = ssub.s32 %s19, %s31
      %s33 = ssub.s32 %s20, %s27
      %s34 = sor.u32 %s32, %s33
      %p35 = scmp.eq.s32.totalorder %s34, 0
      %s37 = sadd.s32 %s36, 1
      %s38 = scalar_select %p35, %s36, %s37
      %p41 = pneg %p35
      %p42 = scmp.eq.s32.totalorder %s12, 1
      %p43 = por %p41, %p42
      %p44 = scmp.ne.s32.totalorder %s36, %s39
      %p45 = scmp.eq.s32.totalorder %s12, 0
      %p46 = por %p44, %p45
      %p47 = scmp.ne.s32.totalorder %s36, %s39
      %p48 = scmp.eq.s32.totalorder %s17, 1
      %p49 = por %p47, %p48
      %p50 = scmp.ne.s32.totalorder %s39, %s40
      %p51 = scmp.eq.s32.totalorder %s17, 0
      %p52 = por %p50, %p51
      %p53 = scmp.ne.s32.totalorder %s39, %s40
      %p54 = scmp.eq.s32.totalorder %s18, 1
      %p55 = por %p53, %p54
      %p57 = scmp.ne.s32.totalorder %s40, %s56
      %p58 = scmp.eq.s32.totalorder %s18, 0
      %p59 = por %p57, %p58
      %s60 = ssub.s32 %s19, %s31
      %p61 = scmp.eq.s32.totalorder %s60, 0
      %s63 = sadd.s32 %s62, 1
      %s64 = scalar_select %p61, %s62, %s63
      %p67 = pneg %p61
      %p68 = scmp.eq.s32.totalorder %s12, 1
      %p69 = por %p67, %p68
      %p70 = scmp.ne.s32.totalorder %s62, %s65
      %p71 = scmp.eq.s32.totalorder %s12, 0
      %p72 = por %p70, %p71
      %p73 = scmp.ne.s32.totalorder %s62, %s65
      %p74 = scmp.eq.s32.totalorder %s17, 1
      %p75 = por %p73, %p74
      %p76 = scmp.ne.s32.totalorder %s65, %s66
      %p77 = scmp.eq.s32.totalorder %s17, 0
      %p78 = por %p76, %p77
      %p79 = scmp.ne.s32.totalorder %s65, %s66
      %p80 = scmp.eq.s32.totalorder %s18, 1
      %p81 = por %p79, %p80
      %p83 = scmp.ne.s32.totalorder %s66, %s82
      %p84 = scmp.eq.s32.totalorder %s18, 0
      %p85 = por %p83, %p84
      %s86 = ssub.s32 %s19, %s31
      %p87 = scmp.eq.s32.totalorder %s86, 0
      %s89 = sadd.s32 %s88, 1
      %s90 = scalar_select %p87, %s88, %s89
      %p93 = pneg %p87
      %p94 = scmp.eq.s32.totalorder %s12, 1
      %p95 = por %p93, %p94
      %p96 = scmp.ne.s32.totalorder %s88, %s91
      %p97 = scmp.eq.s32.totalorder %s12, 0
      %p98 = por %p96, %p97
      %p99 = scmp.ne.s32.totalorder %s88, %s91
      %p100 = scmp.eq.s32.totalorder %s17, 1
      %p101 = por %p99, %p100
      %p102 = scmp.ne.s32.totalorder %s91, %s92
      %p103 = scmp.eq.s32.totalorder %s17, 0
      %p104 = por %p102, %p103
      %p105 = scmp.ne.s32.totalorder %s91, %s92
      %p106 = scmp.eq.s32.totalorder %s18, 1
      %p107 = por %p105, %p106
      %p109 = scmp.ne.s32.totalorder %s92, %s108
      %p110 = scmp.eq.s32.totalorder %s18, 0
      %p111 = por %p109, %p110
      %s112 = ssub.s32 %s19, %s31
      %s113 = ssub.s32 %s20, %s27
      %s114 = sor.u32 %s112, %s113
      %p115 = scmp.eq.s32.totalorder %s114, 0
      %s117 = sadd.s32 %s116, 1
      %s118 = scalar_select %p115, %s116, %s117
      %p121 = pneg %p115
      %p122 = scmp.eq.s32.totalorder %s12, 1
      %p123 = por %p121, %p122
      %p124 = scmp.ne.s32.totalorder %s116, %s119
      %p125 = scmp.eq.s32.totalorder %s12, 0
      %p126 = por %p124, %p125
      %p127 = scmp.ne.s32.totalorder %s116, %s119
      %p128 = scmp.eq.s32.totalorder %s17, 1
      %p129 = por %p127, %p128
      %p130 = scmp.ne.s32.totalorder %s119, %s120
      %p131 = scmp.eq.s32.totalorder %s17, 0
      %p132 = por %p130, %p131
      %p133 = scmp.ne.s32.totalorder %s119, %s120
      %p134 = scmp.eq.s32.totalorder %s18, 1
      %p135 = por %p133, %p134
      %p137 = scmp.ne.s32.totalorder %s120, %s136
      %p138 = scmp.eq.s32.totalorder %s18, 0
      %p139 = por %p137, %p138
      %p140 = scmp.le.s32.totalorder 1, %s12
      %p141 = scmp.lt.s32.totalorder %s12, 3
      %p142 = pnand %p140, %p141
      %p143 = pneg %p142
      // Predicated region
      $region9: #{tpu_custom_call.1} parent=5 // pred_check
        _
      $region10: #{tpu_custom_call.1} parent=5 // pred_check_branch
        %145 = sbr.rel (%p142) target = $region12
      $region11: #{tpu_custom_call.1} parent=5 // pred_region
        %s146 = ssub.s32 %s12, 1
      $region12: #{tpu_custom_call.1} parent=5 // pred_fallthru
        _
      %p147 = scmp.lt.s32.totalorder %s12, 2
      // Predicated region
      $region13: #{tpu_custom_call.1} parent=5 // pred_check
        %p148 = pneg %p147
      $region14: #{tpu_custom_call.1} parent=5 // pred_check_branch
        %150 = sbr.rel (%p148) target = $region16
      $region15: #{tpu_custom_call.1} parent=5 // pred_region
        // Predicated region
        $region17: #{tpu_custom_call.1} parent=15 // pred_check
          %p151 = pneg %p46
        $region18: #{tpu_custom_call.1} parent=15 // pred_check_branch
          %153 = sbr.rel (%p151) target = $region20
        $region19: #{tpu_custom_call.1} parent=15 // pred_region
          %s154 = smul.u32 4, %s20
          %p155 = scmp.lt.s32.totalorder %s19, 1
          %s156 = scalar_select %p155, %s19, 1
          %p157 = scmp.lt.s32.totalorder %s154, 3
          %s158 = scalar_select %p157, %s154, 3
          %s159 = smul.addr %s156, 4
          %s160 = sadd.s32 %s158, %s159
          %s161 = smul.addr %s160, 8
          %s162 = scalar_lea.vmem %s0, %s161
          %s163 = smul.u32 4, %s20
        $region20: #{tpu_custom_call.1} parent=15 // pred_fallthru
          _
        // Predicated region
        $region21: #{tpu_custom_call.1} parent=15 // pred_check
          %p164 = pneg %p72
        $region22: #{tpu_custom_call.1} parent=15 // pred_check_branch
          %166 = sbr.rel (%p164) target = $region24
        $region23: #{tpu_custom_call.1} parent=15 // pred_region
          %p167 = scmp.lt.s32.totalorder %s19, 1
          %s168 = scalar_select %p167, %s19, 1
          %s169 = smul.addr %s168, 8
          %s170 = scalar_lea.vmem %s1, %s169
        $region24: #{tpu_custom_call.1} parent=15 // pred_fallthru
          _
        // Predicated region
        $region25: #{tpu_custom_call.1} parent=15 // pred_check
          %p171 = pneg %p98
        $region26: #{tpu_custom_call.1} parent=15 // pred_check_branch
          %173 = sbr.rel (%p171) target = $region28
        $region27: #{tpu_custom_call.1} parent=15 // pred_region
          %p174 = scmp.lt.s32.totalorder %s19, 1
          %s175 = scalar_select %p174, %s19, 1
          %s176 = smul.addr %s175, 2
          %s177 = smul.addr %s176, 8
          %s178 = scalar_lea.vmem %s2, %s177
        $region28: #{tpu_custom_call.1} parent=15 // pred_fallthru
          _
      $region16: #{tpu_custom_call.1} parent=5 // pred_fallthru
        _
      %p179 = scmp.le.s32.totalorder 1, %s12
      %p180 = scmp.lt.s32.totalorder %s12, 3
      %p181 = pnand %p179, %p180
      %p182 = pneg %p181
      // Predicated region
      $region29: #{tpu_custom_call.1} parent=5 // pred_check
        _
      $region30: #{tpu_custom_call.1} parent=5 // pred_check_branch
        %184 = sbr.rel (%p181) target = $region32
      $region31: #{tpu_custom_call.1} parent=5 // pred_region
        %s185 = ssub.s32 %s12, 1
        %s186 = smul.u32 4, %s22
        %p187 = scmp.lt.s32.totalorder %s21, 1
        %s188 = scalar_select %p187, %s21, 1
        %p189 = scmp.lt.s32.totalorder %s186, 3
        %s190 = scalar_select %p189, %s186, 3
        %s191 = smul.addr %s188, 4
        %s192 = sadd.s32 %s190, %s191
        %s193 = smul.addr %s192, 8
        %s194 = scalar_lea.vmem %s0, %s193
        %p195 = pneg %p52
        %p196 = pneg %p49
        %p197 = scmp.lt.s32.totalorder %s21, 1
        %s198 = scalar_select %p197, %s21, 1
        %s199 = smul.addr %s198, 8
        %s200 = scalar_lea.vmem %s1, %s199
        %p201 = pneg %p78
        %p202 = pneg %p75
        %p203 = scmp.lt.s32.totalorder %s21, 1
        %s204 = scalar_select %p203, %s21, 1
        %s205 = smul.addr %s204, 2
        %s206 = smul.addr %s205, 8
        %s207 = scalar_lea.vmem %s2, %s206
        %p208 = pneg %p104
        %p209 = pneg %p101
        %p210 = pneg %p132
        %p211 = pneg %p129
        %s212 = sand.u32 %s119, 1
        %s213 = scalar_lea.sflag [#allocation3], %s212
        %s214 = sand.u32 %s119, 1
        %s215 = smul.addr %s214, 32
        %s216 = scalar_lea.vmem [#allocation2], %s215
        %s217 = smul.u32 4, %s22
        %p218 = scmp.lt.s32.totalorder %s21, 1
        %s219 = scalar_select %p218, %s21, 1
        %p220 = scmp.lt.s32.totalorder %s217, 3
        %s221 = scalar_select %p220, %s217, 3
        %s222 = smul.addr %s219, 4
        %s223 = sadd.s32 %s221, %s222
        %s224 = smul.addr %s223, 8
        %s225 = scalar_lea.vmem %s0, %s224
        %s226 = smul.u32 4, %s22
        %p227 = scmp.lt.s32.totalorder %s21, 1
        %s228 = scalar_select %p227, %s21, 1
        %s229 = smul.addr %s228, 8
        %s230 = scalar_lea.vmem %s1, %s229
        %p231 = scmp.lt.s32.totalorder %s21, 1
        %s232 = scalar_select %p231, %s21, 1
        %s233 = smul.addr %s232, 2
        %s234 = smul.addr %s233, 8
        %s235 = scalar_lea.vmem %s2, %s234
        %s236 = smul.u32 4, %s22
        %v237 = vld [vmem:[%s225] sm:$0xff]
        %v238 = vld [vmem:[%s225 + $0x8] sm:$0xff]
        %v239 = vld [vmem:[%s225 + $0x10] sm:$0xff]
        %v240 = vld [vmem:[%s225 + $0x18] sm:$0xff]
        %v241 = vld [vmem:[%s230] sm:$0x1f]
        %v242 = vld [vmem:[%s235] sm:$0xff]
        %v243 = vld [vmem:[%s235 + $0x8] sm:$0xff]
        %vm244 = vcmask 39936
        %v246 = vsel %vm244, %v237, 0
        %v249 = vsel %vm244, %v238, 0
        %v252 = vsel %vm244, %v239, 0
        %v255 = vsel %vm244, %v240, 0
        %vm257 = vcmask 1044480
        %v259 = vsel %vm257, %v241, 0
        %261 = vmatprep.subr.mxu0 0.0
        %262 = vmatpush1.msra.mxu0 %v259
        %263 = vmatprep.subr.mxu0 0.0
        %264 = vmatpush1.msra.mxu0 0.0
        %265 = vmatprep.subr.mxu0 0.0
        %266 = vmatpush1.msra.mxu0 0.0
        %267 = vmatprep.subr.mxu0 0.0
        %268 = vmatpush1.msra.mxu0 0.0
        %269 = vmatprep.subr.mxu0 0.0
        %270 = vmatpush1.msra.mxu0 0.0
        %271 = vmatprep.subr.mxu0 0.0
        %272 = vmatpush1.msra.mxu0 0.0
        %273 = vmatprep.subr.mxu0 0.0
        %274 = vmatpush1.msra.mxu0 0.0
        %275 = vmatprep.subr.mxu0 0.0
        %276 = vmatpush1.msra.mxu0 0.0
        %277 = vmatprep.subr.mxu0 0.0
        %278 = vmatpush1.msra.mxu0 0.0
        %279 = vmatprep.subr.mxu0 0.0
        %280 = vmatpush1.msra.mxu0 0.0
        %281 = vmatprep.subr.mxu0 0.0
        %282 = vmatpush1.msra.mxu0 0.0
        %283 = vmatprep.subr.mxu0 0.0
        %284 = vmatpush1.msra.mxu0 0.0
        %285 = vmatprep.subr.mxu0 0.0
        %286 = vmatpush1.msra.mxu0 0.0
        %287 = vmatprep.subr.mxu0 0.0
        %288 = vmatpush1.msra.mxu0 0.0
        %289 = vmatprep.subr.mxu0 0.0
        %290 = vmatpush1.msra.mxu0 0.0
        %291 = vmatprep.subr.mxu0 0.0
        %292 = vmatpush1.msra.mxu0 0.0
        %293 = vmatprep.subr.mxu0 0.0
        %294 = vmatpush1.msra.mxu0 0.0
        %295 = vmatprep.subr.mxu0 0.0
        %296 = vmatpush1.msra.mxu0 0.0
        %297 = vmatprep.subr.mxu0 0.0
        %298 = vmatpush1.msra.mxu0 0.0
        %299 = vmatprep.subr.mxu0 0.0
        %300 = vmatpush1.msra.mxu0 0.0
        %301 = vmatprep.subr.mxu0 0.0
        %302 = vmatpush1.msra.mxu0 0.0
        %303 = vmatprep.subr.mxu0 0.0
        %304 = vmatpush1.msra.mxu0 0.0
        %305 = vmatprep.subr.mxu0 0.0
        %306 = vmatpush1.msra.mxu0 0.0
        %307 = vmatprep.subr.mxu0 0.0
        %308 = vmatpush1.msra.mxu0 0.0
        %309 = vmatprep.subr.mxu0 0.0
        %310 = vmatpush1.msra.mxu0 0.0
        %311 = vmatprep.subr.mxu0 0.0
        %312 = vmatpush1.msra.mxu0 0.0
        %313 = vmatprep.subr.mxu0 0.0
        %314 = vmatpush1.msra.mxu0 0.0
        %315 = vmatprep.subr.mxu0 0.0
        %316 = vmatpush1.msra.mxu0 0.0
        %317 = vmatprep.subr.mxu0 0.0
        %318 = vmatpush1.msra.mxu0 0.0
        %319 = vmatprep.subr.mxu0 0.0
        %320 = vmatpush1.msra.mxu0 0.0
        %321 = vmatprep.subr.mxu0 0.0
        %322 = vmatpush1.msra.mxu0 0.0
        %323 = vmatprep.subr.mxu0 0.0
        %324 = vmatpush1.msra.mxu0 0.0
        %325 = vmatprep.mubr.f32.mxu0 0.0
        %326 = vmatmul.mubr.f32.gmra.mrb[0].mxu0 %v246
        %v327 = vpop.f32.mrb[0].mxu0
        %v328 = vadd.f32 0.0, %v327
        %v329 = vpop.f32.mrb[0].mxu0
        %330 = vmatprep.mubr.f32.mxu0 0.0
        %331 = vmatmul.mubr.f32.gmra.mrb[0].mxu0 %v249
        %v332 = vpop.f32.mrb[0].mxu0
        %v333 = vadd.f32 0.0, %v332
        %v334 = vpop.f32.mrb[0].mxu0
        %335 = vmatprep.mubr.f32.mxu0 0.0
        %336 = vmatmul.mubr.f32.gmra.mrb[0].mxu0 %v252
        %v337 = vpop.f32.mrb[0].mxu0
        %v338 = vadd.f32 0.0, %v337
        %v339 = vpop.f32.mrb[0].mxu0
        %340 = vmatprep.mubr.f32.mxu0 0.0
        %341 = vmatmul.mubr.f32.gmra.mrb[0].mxu0 %v255
        %v342 = vpop.f32.mrb[0].mxu0
        %v343 = vadd.f32 0.0, %v342
        %v344 = vpop.f32.mrb[0].mxu0
        %345 = vdwg.mxu0
        %v346 = vmax.f32 %v328, 0.0
        %v347 = vmax.f32 %v333, 0.0
        %v348 = vmax.f32 %v338, 0.0
        %v349 = vmax.f32 %v343, 0.0
        %v350 = vlaneseq
        %v351 = vand.u32 %v350, 127
        %v356 = vand.u32 %v346, 4294967280
        %v357 = vand.u32 %v347, 4294967280
        %v358 = vand.u32 %v348, 4294967280
        %v359 = vand.u32 %v349, 4294967280
        %v360 = vor.u32 %v356, %v351
        %v361 = vor.u32 %v357, %v351
        %v362 = vor.u32 %v358, %v351
        %v363 = vor.u32 %v359, %v351
        %vm364 = vcmask 130048
        %v365 = vsel %vm364, %v360, 2147483647
        %v366 = vand.u32 %v365, 65535
        %v367 = vshra.s32 %v365, 16
        %v368 = vcvt.s32.f32 %v366
        %v369 = vcvt.s32.f32 %v367
        %370 = vmin.xlane.f32.xlu0 %v369
        %v371 = vpop.xlane.xlu0 %370
        %vm372 = vcmp.eq.f32.partialorder %v369, %v371
        %v373 = vsel %vm372, %v368, inf
        %374 = vmin.xlane.f32.xlu0 %v373
        %v375 = vpop.xlane.xlu0 %374
        %v376 = vcvt.f32.s32 %v375
        %v377 = vcvt.f32.s32 %v371
        %v378 = vshll.u32 %v377, 16
        %v379 = vadd.s32 %v378, %v376
        %v380 = vsel %vm364, %v361, 2147483647
        %v381 = vand.u32 %v380, 65535
        %v382 = vshra.s32 %v380, 16
        %v383 = vcvt.s32.f32 %v381
        %v384 = vcvt.s32.f32 %v382
        %385 = vmin.xlane.f32.xlu0 %v384
        %v386 = vpop.xlane.xlu0 %385
        %vm387 = vcmp.eq.f32.partialorder %v384, %v386
        %v388 = vsel %vm387, %v383, inf
        %389 = vmin.xlane.f32.xlu0 %v388
        %v390 = vpop.xlane.xlu0 %389
        %v391 = vcvt.f32.s32 %v390
        %v392 = vcvt.f32.s32 %v386
        %v393 = vshll.u32 %v392, 16
        %v394 = vadd.s32 %v393, %v391
        %v395 = vsel %vm364, %v362, 2147483647
        %v396 = vand.u32 %v395, 65535
        %v397 = vshra.s32 %v395, 16
        %v398 = vcvt.s32.f32 %v396
        %v399 = vcvt.s32.f32 %v397
        %400 = vmin.xlane.f32.xlu0 %v399
        %v401 = vpop.xlane.xlu0 %400
        %vm402 = vcmp.eq.f32.partialorder %v399, %v401
        %v403 = vsel %vm402, %v398, inf
        %404 = vmin.xlane.f32.xlu0 %v403
        %v405 = vpop.xlane.xlu0 %404
        %v406 = vcvt.f32.s32 %v405
        %v407 = vcvt.f32.s32 %v401
        %v408 = vshll.u32 %v407, 16
        %v409 = vadd.s32 %v408, %v406
        %v410 = vsel %vm364, %v363, 2147483647
        %v411 = vand.u32 %v410, 65535
        %v412 = vshra.s32 %v410, 16
        %v413 = vcvt.s32.f32 %v411
        %v414 = vcvt.s32.f32 %v412
        %415 = vmin.xlane.f32.xlu0 %v414
        %v416 = vpop.xlane.xlu0 %415
        %vm417 = vcmp.eq.f32.partialorder %v414, %v416
        %v418 = vsel %vm417, %v413, inf
        %419 = vmin.xlane.f32.xlu0 %v418
        %v420 = vpop.xlane.xlu0 %419
        %v421 = vcvt.f32.s32 %v420
        %v422 = vcvt.f32.s32 %v416
        %v423 = vshll.u32 %v422, 16
        %v424 = vadd.s32 %v423, %v421
        %v425 = vand.u32 %v379, 4294967280
        %v426 = vand.u32 %v394, 4294967280
        %v427 = vand.u32 %v409, 4294967280
        %v428 = vand.u32 %v424, 4294967280
        %vm433 = vcmp.eq.s32.totalorder %v360, %v379
        %vm434 = vcmp.eq.s32.totalorder %v361, %v394
        %vm435 = vcmp.eq.s32.totalorder %v362, %v409
        %vm436 = vcmp.eq.s32.totalorder %v363, %v424
        %v437 = vadd.f32 %v425, 1e-08
        %v438 = vadd.f32 %v426, 1e-08
        %v439 = vadd.f32 %v427, 1e-08
        %v440 = vadd.f32 %v428, 1e-08
        %v441 = vrcp.pop %v437
        %v442 = vmul.f32 1.0, %v441
        %v443 = vrcp.pop %v438
        %v444 = vmul.f32 1.0, %v443
        %v445 = vrcp.pop %v439
        %v446 = vmul.f32 1.0, %v445
        %v447 = vrcp.pop %v440
        %v448 = vmul.f32 1.0, %v447
        %v449 = vsel %vm433, %v442, 0.0
        %v450 = vsel %vm434, %v444, 0.0
        %v451 = vsel %vm435, %v446, 0.0
        %v452 = vsel %vm436, %v448, 0.0
        %v453 = vadd.f32 %v442, 0.0
        %v454 = vadd.f32 %v444, 0.0
        %v455 = vadd.f32 %v446, 0.0
        %v456 = vadd.f32 %v448, 0.0
        %v457 = vsel %vm433, 2147483647, %v360
        %v458 = vsel %vm434, 2147483647, %v361
        %v459 = vsel %vm435, 2147483647, %v362
        %v460 = vsel %vm436, 2147483647, %v363
        %v461 = vsel %vm364, %v457, 2147483647
        %v462 = vand.u32 %v461, 65535
        %v463 = vshra.s32 %v461, 16
        %v464 = vcvt.s32.f32 %v462
        %v465 = vcvt.s32.f32 %v463
        %466 = vmin.xlane.f32.xlu0 %v465
        %v467 = vpop.xlane.xlu0 %466
        %vm468 = vcmp.eq.f32.partialorder %v465, %v467
        %v469 = vsel %vm468, %v464, inf
        %470 = vmin.xlane.f32.xlu0 %v469
        %v471 = vpop.xlane.xlu0 %470
        %v472 = vcvt.f32.s32 %v471
        %v473 = vcvt.f32.s32 %v467
        %v474 = vshll.u32 %v473, 16
        %v475 = vadd.s32 %v474, %v472
        %v476 = vsel %vm364, %v458, 2147483647
        %v477 = vand.u32 %v476, 65535
        %v478 = vshra.s32 %v476, 16
        %v479 = vcvt.s32.f32 %v477
        %v480 = vcvt.s32.f32 %v478
        %481 = vmin.xlane.f32.xlu0 %v480
        %v482 = vpop.xlane.xlu0 %481
        %vm483 = vcmp.eq.f32.partialorder %v480, %v482
        %v484 = vsel %vm483, %v479, inf
        %485 = vmin.xlane.f32.xlu0 %v484
        %v486 = vpop.xlane.xlu0 %485
        %v487 = vcvt.f32.s32 %v486
        %v488 = vcvt.f32.s32 %v482
        %v489 = vshll.u32 %v488, 16
        %v490 = vadd.s32 %v489, %v487
        %v491 = vsel %vm364, %v459, 2147483647
        %v492 = vand.u32 %v491, 65535
        %v493 = vshra.s32 %v491, 16
        %v494 = vcvt.s32.f32 %v492
        %v495 = vcvt.s32.f32 %v493
        %496 = vmin.xlane.f32.xlu0 %v495
        %v497 = vpop.xlane.xlu0 %496
        %vm498 = vcmp.eq.f32.partialorder %v495, %v497
        %v499 = vsel %vm498, %v494, inf
        %500 = vmin.xlane.f32.xlu0 %v499
        %v501 = vpop.xlane.xlu0 %500
        %v502 = vcvt.f32.s32 %v501
        %v503 = vcvt.f32.s32 %v497
        %v504 = vshll.u32 %v503, 16
        %v505 = vadd.s32 %v504, %v502
        %v506 = vsel %vm364, %v460, 2147483647
        %v507 = vand.u32 %v506, 65535
        %v508 = vshra.s32 %v506, 16
        %v509 = vcvt.s32.f32 %v507
        %v510 = vcvt.s32.f32 %v508
        %511 = vmin.xlane.f32.xlu0 %v510
        %v512 = vpop.xlane.xlu0 %511
        %vm513 = vcmp.eq.f32.partialorder %v510, %v512
        %v514 = vsel %vm513, %v509, inf
        %515 = vmin.xlane.f32.xlu0 %v514
        %v516 = vpop.xlane.xlu0 %515
        %v517 = vcvt.f32.s32 %v516
        %v518 = vcvt.f32.s32 %v512
        %v519 = vshll.u32 %v518, 16
        %v520 = vadd.s32 %v519, %v517
        %v521 = vand.u32 %v475, 4294967280
        %v522 = vand.u32 %v490, 4294967280
        %v523 = vand.u32 %v505, 4294967280
        %v524 = vand.u32 %v520, 4294967280
        %vm529 = vcmp.eq.s32.totalorder %v457, %v475
        %vm530 = vcmp.eq.s32.totalorder %v458, %v490
        %vm531 = vcmp.eq.s32.totalorder %v459, %v505
        %vm532 = vcmp.eq.s32.totalorder %v460, %v520
        %v533 = vadd.f32 %v521, 1e-08
        %v534 = vadd.f32 %v522, 1e-08
        %v535 = vadd.f32 %v523, 1e-08
        %v536 = vadd.f32 %v524, 1e-08
        %v537 = vrcp.pop %v533
        %v538 = vmul.f32 1.0, %v537
        %v539 = vrcp.pop %v534
        %v540 = vmul.f32 1.0, %v539
        %v541 = vrcp.pop %v535
        %v542 = vmul.f32 1.0, %v541
        %v543 = vrcp.pop %v536
        %v544 = vmul.f32 1.0, %v543
        %v545 = vsel %vm529, %v538, %v449
        %v546 = vsel %vm530, %v540, %v450
        %v547 = vsel %vm531, %v542, %v451
        %v548 = vsel %vm532, %v544, %v452
        %v549 = vadd.f32 %v453, %v538
        %v550 = vadd.f32 %v454, %v540
        %v551 = vadd.f32 %v455, %v542
        %v552 = vadd.f32 %v456, %v544
        %v553 = vsel %vm529, 2147483647, %v457
        %v554 = vsel %vm530, 2147483647, %v458
        %v555 = vsel %vm531, 2147483647, %v459
        %v556 = vsel %vm532, 2147483647, %v460
        %v557 = vsel %vm364, %v553, 2147483647
        %v558 = vand.u32 %v557, 65535
        %v559 = vshra.s32 %v557, 16
        %v560 = vcvt.s32.f32 %v558
        %v561 = vcvt.s32.f32 %v559
        %562 = vmin.xlane.f32.xlu0 %v561
        %v563 = vpop.xlane.xlu0 %562
        %vm564 = vcmp.eq.f32.partialorder %v561, %v563
        %v565 = vsel %vm564, %v560, inf
        %566 = vmin.xlane.f32.xlu0 %v565
        %v567 = vpop.xlane.xlu0 %566
        %v568 = vcvt.f32.s32 %v567
        %v569 = vcvt.f32.s32 %v563
        %v570 = vshll.u32 %v569, 16
        %v571 = vadd.s32 %v570, %v568
        %v572 = vsel %vm364, %v554, 2147483647
        %v573 = vand.u32 %v572, 65535
        %v574 = vshra.s32 %v572, 16
        %v575 = vcvt.s32.f32 %v573
        %v576 = vcvt.s32.f32 %v574
        %577 = vmin.xlane.f32.xlu0 %v576
        %v578 = vpop.xlane.xlu0 %577
        %vm579 = vcmp.eq.f32.partialorder %v576, %v578
        %v580 = vsel %vm579, %v575, inf
        %581 = vmin.xlane.f32.xlu0 %v580
        %v582 = vpop.xlane.xlu0 %581
        %v583 = vcvt.f32.s32 %v582
        %v584 = vcvt.f32.s32 %v578
        %v585 = vshll.u32 %v584, 16
        %v586 = vadd.s32 %v585, %v583
        %v587 = vsel %vm364, %v555, 2147483647
        %v588 = vand.u32 %v587, 65535
        %v589 = vshra.s32 %v587, 16
        %v590 = vcvt.s32.f32 %v588
        %v591 = vcvt.s32.f32 %v589
        %592 = vmin.xlane.f32.xlu0 %v591
        %v593 = vpop.xlane.xlu0 %592
        %vm594 = vcmp.eq.f32.partialorder %v591, %v593
        %v595 = vsel %vm594, %v590, inf
        %596 = vmin.xlane.f32.xlu0 %v595
        %v597 = vpop.xlane.xlu0 %596
        %v598 = vcvt.f32.s32 %v597
        %v599 = vcvt.f32.s32 %v593
        %v600 = vshll.u32 %v599, 16
        %v601 = vadd.s32 %v600, %v598
        %v602 = vsel %vm364, %v556, 2147483647
        %v603 = vand.u32 %v602, 65535
        %v604 = vshra.s32 %v602, 16
        %v605 = vcvt.s32.f32 %v603
        %v606 = vcvt.s32.f32 %v604
        %607 = vmin.xlane.f32.xlu0 %v606
        %v608 = vpop.xlane.xlu0 %607
        %vm609 = vcmp.eq.f32.partialorder %v606, %v608
        %v610 = vsel %vm609, %v605, inf
        %611 = vmin.xlane.f32.xlu0 %v610
        %v612 = vpop.xlane.xlu0 %611
        %v613 = vcvt.f32.s32 %v612
        %v614 = vcvt.f32.s32 %v608
        %v615 = vshll.u32 %v614, 16
        %v616 = vadd.s32 %v615, %v613
        %v617 = vand.u32 %v571, 4294967280
        %v618 = vand.u32 %v586, 4294967280
        %v619 = vand.u32 %v601, 4294967280
        %v620 = vand.u32 %v616, 4294967280
        %vm625 = vcmp.eq.s32.totalorder %v553, %v571
        %vm626 = vcmp.eq.s32.totalorder %v554, %v586
        %vm627 = vcmp.eq.s32.totalorder %v555, %v601
        %vm628 = vcmp.eq.s32.totalorder %v556, %v616
        %v629 = vadd.f32 %v617, 1e-08
        %v630 = vadd.f32 %v618, 1e-08
        %v631 = vadd.f32 %v619, 1e-08
        %v632 = vadd.f32 %v620, 1e-08
        %v633 = vrcp.pop %v629
        %v634 = vmul.f32 1.0, %v633
        %v635 = vrcp.pop %v630
        %v636 = vmul.f32 1.0, %v635
        %v637 = vrcp.pop %v631
        %v638 = vmul.f32 1.0, %v637
        %v639 = vrcp.pop %v632
        %v640 = vmul.f32 1.0, %v639
        %v641 = vsel %vm625, %v634, %v545
        %v642 = vsel %vm626, %v636, %v546
        %v643 = vsel %vm627, %v638, %v547
        %v644 = vsel %vm628, %v640, %v548
        %v645 = vadd.f32 %v549, %v634
        %v646 = vadd.f32 %v550, %v636
        %v647 = vadd.f32 %v551, %v638
        %v648 = vadd.f32 %v552, %v640
        %v649 = vsel %vm625, 2147483647, %v553
        %v650 = vsel %vm626, 2147483647, %v554
        %v651 = vsel %vm627, 2147483647, %v555
        %v652 = vsel %vm628, 2147483647, %v556
        %v653 = vsel %vm364, %v649, 2147483647
        %v654 = vand.u32 %v653, 65535
        %v655 = vshra.s32 %v653, 16
        %v656 = vcvt.s32.f32 %v654
        %v657 = vcvt.s32.f32 %v655
        %658 = vmin.xlane.f32.xlu0 %v657
        %v659 = vpop.xlane.xlu0 %658
        %vm660 = vcmp.eq.f32.partialorder %v657, %v659
        %v661 = vsel %vm660, %v656, inf
        %662 = vmin.xlane.f32.xlu0 %v661
        %v663 = vpop.xlane.xlu0 %662
        %v664 = vcvt.f32.s32 %v663
        %v665 = vcvt.f32.s32 %v659
        %v666 = vshll.u32 %v665, 16
        %v667 = vadd.s32 %v666, %v664
        %v668 = vsel %vm364, %v650, 2147483647
        %v669 = vand.u32 %v668, 65535
        %v670 = vshra.s32 %v668, 16
        %v671 = vcvt.s32.f32 %v669
        %v672 = vcvt.s32.f32 %v670
        %673 = vmin.xlane.f32.xlu0 %v672
        %v674 = vpop.xlane.xlu0 %673
        %vm675 = vcmp.eq.f32.partialorder %v672, %v674
        %v676 = vsel %vm675, %v671, inf
        %677 = vmin.xlane.f32.xlu0 %v676
        %v678 = vpop.xlane.xlu0 %677
        %v679 = vcvt.f32.s32 %v678
        %v680 = vcvt.f32.s32 %v674
        %v681 = vshll.u32 %v680, 16
        %v682 = vadd.s32 %v681, %v679
        %v683 = vsel %vm364, %v651, 2147483647
        %v684 = vand.u32 %v683, 65535
        %v685 = vshra.s32 %v683, 16
        %v686 = vcvt.s32.f32 %v684
        %v687 = vcvt.s32.f32 %v685
        %688 = vmin.xlane.f32.xlu0 %v687
        %v689 = vpop.xlane.xlu0 %688
        %vm690 = vcmp.eq.f32.partialorder %v687, %v689
        %v691 = vsel %vm690, %v686, inf
        %692 = vmin.xlane.f32.xlu0 %v691
        %v693 = vpop.xlane.xlu0 %692
        %v694 = vcvt.f32.s32 %v693
        %v695 = vcvt.f32.s32 %v689
        %v696 = vshll.u32 %v695, 16
        %v697 = vadd.s32 %v696, %v694
        %v698 = vsel %vm364, %v652, 2147483647
        %v699 = vand.u32 %v698, 65535
        %v700 = vshra.s32 %v698, 16
        %v701 = vcvt.s32.f32 %v699
        %v702 = vcvt.s32.f32 %v700
        %703 = vmin.xlane.f32.xlu0 %v702
        %v704 = vpop.xlane.xlu0 %703
        %vm705 = vcmp.eq.f32.partialorder %v702, %v704
        %v706 = vsel %vm705, %v701, inf
        %707 = vmin.xlane.f32.xlu0 %v706
        %v708 = vpop.xlane.xlu0 %707
        %v709 = vcvt.f32.s32 %v708
        %v710 = vcvt.f32.s32 %v704
        %v711 = vshll.u32 %v710, 16
        %v712 = vadd.s32 %v711, %v709
        %v713 = vand.u32 %v667, 4294967280
        %v714 = vand.u32 %v682, 4294967280
        %v715 = vand.u32 %v697, 4294967280
        %v716 = vand.u32 %v712, 4294967280
        %vm721 = vcmp.eq.s32.totalorder %v649, %v667
        %vm722 = vcmp.eq.s32.totalorder %v650, %v682
        %vm723 = vcmp.eq.s32.totalorder %v651, %v697
        %vm724 = vcmp.eq.s32.totalorder %v652, %v712
        %v725 = vadd.f32 %v713, 1e-08
        %v726 = vadd.f32 %v714, 1e-08
        %v727 = vadd.f32 %v715, 1e-08
        %v728 = vadd.f32 %v716, 1e-08
        %v729 = vrcp.pop %v725
        %v730 = vmul.f32 1.0, %v729
        %v731 = vrcp.pop %v726
        %v732 = vmul.f32 1.0, %v731
        %v733 = vrcp.pop %v727
        %v734 = vmul.f32 1.0, %v733
        %v735 = vrcp.pop %v728
        %v736 = vmul.f32 1.0, %v735
        %v737 = vsel %vm721, %v730, %v641
        %v738 = vsel %vm722, %v732, %v642
        %v739 = vsel %vm723, %v734, %v643
        %v740 = vsel %vm724, %v736, %v644
        %v741 = vadd.f32 %v645, %v730
        %v742 = vadd.f32 %v646, %v732
        %v743 = vadd.f32 %v647, %v734
        %v744 = vadd.f32 %v648, %v736
        %v746 = vsel %vm364, %v737, 0
        %v749 = vsel %vm364, %v738, 0
        %v752 = vsel %vm364, %v739, 0
        %v755 = vsel %vm364, %v740, 0
        %757 = vmatprep.subr.mxu0 0.0
        %758 = vmatpush1.msra.mxu0 %v242
        %759 = vmatprep.subr.mxu0 0.0
        %760 = vmatpush1.msra.mxu0 %v243
        %761 = vmatprep.subr.mxu0 0.0
        %762 = vmatpush1.msra.mxu0 0.0
        %763 = vmatprep.subr.mxu0 0.0
        %764 = vmatpush1.msra.mxu0 0.0
        %765 = vmatprep.subr.mxu0 0.0
        %766 = vmatpush1.msra.mxu0 0.0
        %767 = vmatprep.subr.mxu0 0.0
        %768 = vmatpush1.msra.mxu0 0.0
        %769 = vmatprep.subr.mxu0 0.0
        %770 = vmatpush1.msra.mxu0 0.0
        %771 = vmatprep.subr.mxu0 0.0
        %772 = vmatpush1.msra.mxu0 0.0
        %773 = vmatprep.subr.mxu0 0.0
        %774 = vmatpush1.msra.mxu0 0.0
        %775 = vmatprep.subr.mxu0 0.0
        %776 = vmatpush1.msra.mxu0 0.0
        %777 = vmatprep.subr.mxu0 0.0
        %778 = vmatpush1.msra.mxu0 0.0
        %779 = vmatprep.subr.mxu0 0.0
        %780 = vmatpush1.msra.mxu0 0.0
        %781 = vmatprep.subr.mxu0 0.0
        %782 = vmatpush1.msra.mxu0 0.0
        %783 = vmatprep.subr.mxu0 0.0
        %784 = vmatpush1.msra.mxu0 0.0
        %785 = vmatprep.subr.mxu0 0.0
        %786 = vmatpush1.msra.mxu0 0.0
        %787 = vmatprep.subr.mxu0 0.0
        %788 = vmatpush1.msra.mxu0 0.0
        %789 = vmatprep.subr.mxu0 0.0
        %790 = vmatpush1.msra.mxu0 0.0
        %791 = vmatprep.subr.mxu0 0.0
        %792 = vmatpush1.msra.mxu0 0.0
        %793 = vmatprep.subr.mxu0 0.0
        %794 = vmatpush1.msra.mxu0 0.0
        %795 = vmatprep.subr.mxu0 0.0
        %796 = vmatpush1.msra.mxu0 0.0
        %797 = vmatprep.subr.mxu0 0.0
        %798 = vmatpush1.msra.mxu0 0.0
        %799 = vmatprep.subr.mxu0 0.0
        %800 = vmatpush1.msra.mxu0 0.0
        %801 = vmatprep.subr.mxu0 0.0
        %802 = vmatpush1.msra.mxu0 0.0
        %803 = vmatprep.subr.mxu0 0.0
        %804 = vmatpush1.msra.mxu0 0.0
        %805 = vmatprep.subr.mxu0 0.0
        %806 = vmatpush1.msra.mxu0 0.0
        %807 = vmatprep.subr.mxu0 0.0
        %808 = vmatpush1.msra.mxu0 0.0
        %809 = vmatprep.subr.mxu0 0.0
        %810 = vmatpush1.msra.mxu0 0.0
        %811 = vmatprep.subr.mxu0 0.0
        %812 = vmatpush1.msra.mxu0 0.0
        %813 = vmatprep.subr.mxu0 0.0
        %814 = vmatpush1.msra.mxu0 0.0
        %815 = vmatprep.subr.mxu0 0.0
        %816 = vmatpush1.msra.mxu0 0.0
        %817 = vmatprep.subr.mxu0 0.0
        %818 = vmatpush1.msra.mxu0 0.0
        %819 = vmatprep.subr.mxu0 0.0
        %820 = vmatpush1.msra.mxu0 0.0
        %821 = vmatprep.mubr.f32.mxu0 0.0
        %822 = vmatmul.mubr.f32.gmra.mrb[0].mxu0 %v746
        %v823 = vpop.f32.mrb[0].mxu0
        %v824 = vadd.f32 0.0, %v823
        %v825 = vpop.f32.mrb[0].mxu0
        %826 = vmatprep.mubr.f32.mxu0 0.0
        %827 = vmatmul.mubr.f32.gmra.mrb[0].mxu0 %v749
        %v828 = vpop.f32.mrb[0].mxu0
        %v829 = vadd.f32 0.0, %v828
        %v830 = vpop.f32.mrb[0].mxu0
        %831 = vmatprep.mubr.f32.mxu0 0.0
        %832 = vmatmul.mubr.f32.gmra.mrb[0].mxu0 %v752
        %v833 = vpop.f32.mrb[0].mxu0
        %v834 = vadd.f32 0.0, %v833
        %v835 = vpop.f32.mrb[0].mxu0
        %836 = vmatprep.mubr.f32.mxu0 0.0
        %837 = vmatmul.mubr.f32.gmra.mrb[0].mxu0 %v755
        %v838 = vpop.f32.mrb[0].mxu0
        %v839 = vadd.f32 0.0, %v838
        %v840 = vpop.f32.mrb[0].mxu0
        %841 = vdwg.mxu0
        %v842 = vrcp.pop %v741
        %v843 = vmul.f32 1.0, %v842
        %v844 = vrcp.pop %v742
        %v845 = vmul.f32 1.0, %v844
        %v846 = vrcp.pop %v743
        %v847 = vmul.f32 1.0, %v846
        %v848 = vrcp.pop %v744
        %v849 = vmul.f32 1.0, %v848
        %v850 = vmul.f32 %v824, %v843
        %v851 = vmul.f32 %v829, %v845
        %v852 = vmul.f32 %v834, %v847
        %v853 = vmul.f32 %v839, %v849
        %vm854 = vcmask 523264
        %855 = vst.msk [vmem:[%s216] sm:$0xff] %vm854, %v850
        %856 = vst.msk [vmem:[%s216 + $0x8] sm:$0xff] %vm854, %v851
        %857 = vst.msk [vmem:[%s216 + $0x10] sm:$0xff] %vm854, %v852
        %858 = vst.msk [vmem:[%s216 + $0x18] sm:$0xff] %vm854, %v853
        %s859 = sand.u32 %s119, 1
        %s860 = scalar_lea.sflag [#allocation3], %s859
        %s861 = sand.u32 %s119, 1
        %s862 = smul.addr %s861, 32
        %s863 = scalar_lea.vmem [#allocation2], %s862
        // Predicated region
        $region33: #{tpu_custom_call.1} parent=31 // pred_check
          %p864 = pneg %p129
        $region34: #{tpu_custom_call.1} parent=31 // pred_check_branch
          %866 = sbr.rel (%p864) target = $region36
        $region35: #{tpu_custom_call.1} parent=31 // pred_region
          %s867 = smul.u32 4, %s22
          %s869 = ssub.s32 512, 512
          %870 = vsyncadd %s860, %s869
          %s871 = smul.addr %s21, 4
          %s872 = sadd.s32 %s867, %s871
          %s873 = smul.addr %s872, 128
          %s874 = scalar_lea.hbm %s3, %s873
          %s875 = sshll.u32 %s863, 4
          %s876 = int_to_ptr.vmem [resolvable:$true] %s875
          %881 = dma.vmem_to_hbm [thread:$0]  %s876, 512, %s874, %s860, 128, 128, 8
        $region36: #{tpu_custom_call.1} parent=31 // pred_fallthru
          _
      $region32: #{tpu_custom_call.1} parent=5 // pred_fallthru
        _
      %p882 = scmp.le.s32.totalorder 2, %s12
      // Predicated region
      $region37: #{tpu_custom_call.1} parent=5 // pred_check
        %p883 = pneg %p882
      $region38: #{tpu_custom_call.1} parent=5 // pred_check_branch
        %885 = sbr.rel (%p883) target = $region40
      $region39: #{tpu_custom_call.1} parent=5 // pred_region
        %s886 = ssub.s32 %s12, 2
        // Predicated region
        $region41: #{tpu_custom_call.1} parent=39 // pred_check
          %p887 = pneg %p135
        $region42: #{tpu_custom_call.1} parent=39 // pred_check_branch
          %889 = sbr.rel (%p887) target = $region44
        $region43: #{tpu_custom_call.1} parent=39 // pred_region
          %s890 = sand.u32 %s120, 1
          %s891 = scalar_lea.sflag [#allocation3], %s890
          %s892 = sand.u32 %s120, 1
          %s893 = smul.addr %s892, 32
          %s894 = scalar_lea.vmem [#allocation2], %s893
          %895 = dma.done %s891, 512
        $region44: #{tpu_custom_call.1} parent=39 // pred_fallthru
          _
      $region40: #{tpu_custom_call.1} parent=5 // pred_fallthru
        _
    $region6: #{tpu_custom_call.1} parent=1 // loop_footer
      %s16 = sadd.s32 1, %s12
    $region7: #{tpu_custom_call.1} parent=1 // loop_footer_branch
      %11 = sbr.rel target = $region3
    $region8: #{tpu_custom_call.1} parent=1 // loop_exit
      _
    %896 = vsyncpa [#allocation3], 1
    %s897 = scalar_lea.sflag [#allocation3], 1
    %898 = vsyncpa %s897, 1

</llo_original>
